<compile_context>
chip_gen: v7x
topology: tpu7x:2x2x1
jax: 0.10.0
libtpu: 0.0.40
codegen_flags: <defaults>
</compile_context>

<pallas_src>
import functools
import math

import jax
import jax.numpy as jnp
from jax.experimental import pallas as pl
from jax.experimental.pallas import tpu as pltpu

_VMEM_LIMIT = 32 * 1024 * 1024   # fits v5e/v6e (128 MiB) and v7x (64 MiB) physical


# ----------------------------------------------------------------------------
# tile helpers
# ----------------------------------------------------------------------------
def _divisor_tile(dim, pref, aligns=(256, 128)):
    """Largest tile <= pref that divides `dim` and is a multiple of one of
    `aligns` (tried in order, 256 first to keep MXU passes full width)."""
    if dim <= pref:
        return dim
    for align in aligns:
        t = (pref // align) * align
        while t >= align:
            if dim % t == 0:
                return t
            t -= align
    return None


# ----------------------------------------------------------------------------
# Fused linear, single-K-block path (2-D grid, no accumulator scratch):
#   o = [residual +] act( [LayerNorm(x)] @ w + b )
# LN is computed once per M-tile (j == 0) into a VMEM scratch and reused.
# ----------------------------------------------------------------------------
def _linear_1k_kernel(*refs, activation, has_ln, has_res, ln_eps):
    x_ref, w_ref, b_ref = refs[0], refs[1], refs[2]
    idx = 3
    if has_ln:
        lng_ref, lnb_ref = refs[3], refs[4]
        idx = 5
    if has_res:
        res_ref = refs[idx]
        idx += 1
    o_ref = refs[idx]
    idx += 1

    if has_ln:
        xln_ref = refs[idx]          # (tm, K) VMEM scratch, x dtype

        @pl.when(pl.program_id(1) == 0)      # compute LN once per M-tile
        def _():
            xf = x_ref[...].astype(jnp.float32)
            mu = jnp.mean(xf, axis=-1, keepdims=True)
            var = jnp.mean((xf - mu) ** 2, axis=-1, keepdims=True)
            xf = (xf - mu) * jax.lax.rsqrt(var + ln_eps)
            xf = xf * lng_ref[...].astype(jnp.float32) \
                + lnb_ref[...].astype(jnp.float32)
            xln_ref[...] = xf.astype(xln_ref.dtype)

        x = xln_ref[...]
    else:
        x = x_ref[...]

    y = jnp.dot(x, w_ref[...], preferred_element_type=jnp.float32)
    y = y + b_ref[...].astype(jnp.float32)
    if activation == "gelu":
        # torch nn.GELU() default == exact erf-based gelu
        y = jax.nn.gelu(y, approximate=False)
    if has_res:
        y = y + res_ref[...].astype(jnp.float32)
    o_ref[...] = y.astype(o_ref.dtype)


# ----------------------------------------------------------------------------
# Fused linear, K-tiled fallback (3-D grid, f32 accumulator). No LN support
# (the model never needs it: LN calls always have K small enough for 1 block).
# ----------------------------------------------------------------------------
def _linear_kk_kernel(*refs, activation, has_res):
    x_ref, w_ref, b_ref = refs[:3]
    idx = 3
    if has_res:
        res_ref = refs[idx]
        idx += 1
    o_ref, acc_ref = refs[idx], refs[idx + 1]

    k = pl.program_id(2)

    @pl.when(k == 0)
    def _():
        acc_ref[...] = jnp.zeros_like(acc_ref)

    acc_ref[...] += jnp.dot(x_ref[...], w_ref[...],
                            preferred_element_type=jnp.float32)

    @pl.when(k == pl.num_programs(2) - 1)
    def _():
        y = acc_ref[...] + b_ref[...].astype(jnp.float32)
        if activation == "gelu":
            y = jax.nn.gelu(y, approximate=False)
        if has_res:
            y = y + res_ref[...].astype(jnp.float32)
        o_ref[...] = y.astype(o_ref.dtype)


def fused_linear(x, w, b, *, ln=None, residual=None, activation=None,
                 out_dtype=None, tm=512, tn=512, tk=4096, ln_eps=1e-6):
    # NOTE: the epilogue applies the activation BEFORE the residual add; the
    # model never requests both in the same call, so forbid it explicitly.
    assert not (activation is not None and residual is not None)

    M, K = x.shape
    K2, N = w.shape
    assert K == K2
    out_dtype = out_dtype or x.dtype

    # M: ragged tiling (cdiv grid + masked edge) — B*197 has no good divisors.
    tm = M if M <= tm else max(8, (tm // 8) * 8)
    # N: exact divisor preferred (lane-dense stores); else ragged mult. of 128.
    tn = N if N <= tn else (_divisor_tile(N, tn) or max(128, (tn // 128) * 128))
    # K: reduction must be covered exactly — exact divisor or full extent.
    if ln is not None or K <= tk:
        tk = K                                  # LN prologue needs the full row
    else:
        tk = _divisor_tile(K, tk) or K

    n_i, n_j, n_k = pl.cdiv(M, tm), pl.cdiv(N, tn), K // tk

    in_arrays = [x, w, b.reshape(1, N)]
    itemsize = jnp.dtype(x.dtype).itemsize
    cost = pl.CostEstimate(
        flops=2 * M * N * K,
        transcendentals=M * N if activation == "gelu" else 0,
        bytes_accessed=(M * K + n_i * K * N + 2 * M * N) * itemsize)

    if n_k == 1:
        # ---- single-K path: no accumulator, x block resident across j ----
        in_specs = [
            pl.BlockSpec((tm, K), lambda i, j: (i, 0)),
            pl.BlockSpec((K, tn), lambda i, j: (0, j)),
            pl.BlockSpec((1, tn), lambda i, j: (0, j)),
        ]
        scratch = []
        if ln is not None:
            g, beta = ln
            in_arrays += [g.reshape(1, K), beta.reshape(1, K)]
            in_specs += [pl.BlockSpec((1, K), lambda i, j: (0, 0)),
                         pl.BlockSpec((1, K), lambda i, j: (0, 0))]
            scratch.append(pltpu.VMEM((tm, K), x.dtype))
        if residual is not None:
            in_arrays.append(residual)
            in_specs.append(pl.BlockSpec((tm, tn), lambda i, j: (i, j)))
        kernel = functools.partial(
            _linear_1k_kernel, activation=activation, has_ln=ln is not None,
            has_res=residual is not None, ln_eps=ln_eps)
        grid = (n_i, n_j)
        out_spec = pl.BlockSpec((tm, tn), lambda i, j: (i, j))
        # j must stay sequential on one core when the LN scratch is reused
        dims = ("parallel", "arbitrary" if ln is not None else "parallel")
    else:
        # ---- K-tiled fallback (never hit for ViT-B shapes) ----
        assert ln is None
        in_specs = [
            pl.BlockSpec((tm, tk), lambda i, j, k: (i, k)),
            pl.BlockSpec((tk, tn), lambda i, j, k: (k, j)),
            pl.BlockSpec((1, tn), lambda i, j, k: (0, j)),
        ]
        scratch = [pltpu.VMEM((tm, tn), jnp.float32)]
        if residual is not None:
            in_arrays.append(residual)
            in_specs.append(pl.BlockSpec((tm, tn), lambda i, j, k: (i, j)))
        kernel = functools.partial(_linear_kk_kernel, activation=activation,
                                   has_res=residual is not None)
        grid = (n_i, n_j, n_k)
        out_spec = pl.BlockSpec((tm, tn), lambda i, j, k: (i, j))
        dims = ("parallel", "parallel", "arbitrary")

    return pl.pallas_call(
        kernel,
        out_shape=jax.ShapeDtypeStruct((M, N), out_dtype),
        grid=grid,
        in_specs=in_specs,
        out_specs=out_spec,
        scratch_shapes=scratch,
        compiler_params=pltpu.CompilerParams(
            dimension_semantics=dims, vmem_limit_bytes=_VMEM_LIMIT),
        cost_estimate=cost,
    )(*in_arrays)


# ----------------------------------------------------------------------------
# Multi-head attention from the packed (B, S, 3D) qkv projection.
# Several images per grid step (amortizes per-step overhead); 1/sqrt(dh)
# folded into q; softmax divide on the EUP via pl.reciprocal(approx=True);
# head outputs combined with a pairwise (128-lane) concat and one lane-dense
# store per image.
# ----------------------------------------------------------------------------
def _mha_kernel(qkv_ref, o_ref, *, heads, dh, scale):
    D = heads * dh
    n_img = qkv_ref.shape[0]
    for img in range(n_img):                      # static unroll (small)
        qkv = qkv_ref[img]                        # (S, 3D) for one image
        outs = []
        for h in range(heads):                    # static unroll; heads small
            q = qkv[:, h * dh:(h + 1) * dh] * scale          # scale folded in
            kk = qkv[:, D + h * dh:D + (h + 1) * dh]
            v = qkv[:, 2 * D + h * dh:2 * D + (h + 1) * dh]
            # TODO(synk): dh=64 uses only 64 of the 256 MXU rows on v6e/v7x; a
            # block-diagonal head-pair matmul would double MXU utilization.
            s = jax.lax.dot_general(q, kk, (((1,), (1,)), ((), ())),
                                    preferred_element_type=jnp.float32)
            s = s - jnp.max(s, axis=-1, keepdims=True)
            p = jnp.exp(s)
            inv = pl.reciprocal(jnp.sum(p, axis=-1, keepdims=True), approx=True)
            p = p * inv
            outs.append(jnp.dot(p.astype(v.dtype), v,
                                preferred_element_type=jnp.float32))
        # balanced pairwise concat: slabs become 2*dh (=128 for ViT-B) wide
        # before the final joins; single cast + lane-dense store per image.
        while len(outs) > 1:
            outs = [jnp.concatenate(outs[i:i + 2], axis=-1)
                    for i in range(0, len(outs), 2)]
        o_ref[img] = outs[0].astype(o_ref.dtype)


def multihead_attention(qkv, heads, *, bb=2):
    B, S, threeD = qkv.shape
    D = threeD // 3
    dh = D // heads
    bb = min(bb, B)
    kernel = functools.partial(_mha_kernel, heads=heads, dh=dh,
                               scale=1.0 / math.sqrt(dh))
    itemsize = jnp.dtype(qkv.dtype).itemsize
    cost = pl.CostEstimate(
        flops=4 * B * heads * S * S * dh,
        transcendentals=B * heads * S * S,
        bytes_accessed=(B * S * threeD + B * S * D) * itemsize)
    return pl.pallas_call(
        kernel,
        out_shape=jax.ShapeDtypeStruct((B, S, D), qkv.dtype),
        grid=(pl.cdiv(B, bb),),
        in_specs=[pl.BlockSpec((bb, S, threeD), lambda i: (i, 0, 0))],
        out_specs=pl.BlockSpec((bb, S, D), lambda i: (i, 0, 0)),
        compiler_params=pltpu.CompilerParams(
            dimension_semantics=("parallel",), vmem_limit_bytes=_VMEM_LIMIT),
        cost_estimate=cost,
    )(qkv)


# ----------------------------------------------------------------------------
# cls-token concat + positional-embedding add, fused into one small kernel
# with a lane-dense (bb, S, D) output block.
# ----------------------------------------------------------------------------
def _assemble_kernel(tok_ref, cls_ref, pos_ref, o_ref):
    bb, _, d = tok_ref.shape
    pos = pos_ref[...]                               # (1, S, D)
    cls_row = cls_ref[...] + pos[:, 0:1, :]          # (1, 1, D)
    body = tok_ref[...] + pos[:, 1:, :]              # (bb, N, D)
    o_ref[...] = jnp.concatenate(
        [jnp.broadcast_to(cls_row, (bb, 1, d)), body], axis=1
    ).astype(o_ref.dtype)


def assemble_sequence(tokens, cls_token, pos_emb, *, bb=8):
    B, N, D = tokens.shape
    S = N + 1
    bb = min(bb, B)
    return pl.pallas_call(
        _assemble_kernel,
        out_shape=jax.ShapeDtypeStruct((B, S, D), tokens.dtype),
        grid=(pl.cdiv(B, bb),),
        in_specs=[pl.BlockSpec((bb, N, D), lambda i: (i, 0, 0)),
                  pl.BlockSpec((1, 1, D), lambda i: (0, 0, 0)),
                  pl.BlockSpec((1, S, D), lambda i: (0, 0, 0))],
        out_specs=pl.BlockSpec((bb, S, D), lambda i: (i, 0, 0)),
        compiler_params=pltpu.CompilerParams(dimension_semantics=("parallel",)),
    )(tokens, cls_token.astype(tokens.dtype), pos_emb.astype(tokens.dtype))


# ----------------------------------------------------------------------------
# Fused classifier head:
#   final LayerNorm (cls row only) -> bottleneck Linear -> [ReLU ->]
#   BatchNorm1d(eval, running stats) -> fc.  One kernel, two outputs.
# ----------------------------------------------------------------------------
def _head_kernel(x_ref, lng_ref, lnb_ref, bw_ref, bb_ref,
                 bng_ref, bnb_ref, bnm_ref, bnv_ref, fw_ref, fb_ref,
                 feat_ref, logit_ref, *, ln_eps, bn_eps, relu):
    x = x_ref[...].astype(jnp.float32)
    mu = jnp.mean(x, axis=-1, keepdims=True)
    var = jnp.mean((x - mu) ** 2, axis=-1, keepdims=True)
    x = (x - mu) * jax.lax.rsqrt(var + ln_eps)
    x = x * lng_ref[...].astype(jnp.float32) + lnb_ref[...].astype(jnp.float32)

    f = jnp.dot(x.astype(bw_ref.dtype), bw_ref[...],
                preferred_element_type=jnp.float32) + bb_ref[...].astype(jnp.float32)
    if relu:
        # TODO(synk): Dropout(p=0.5) preceding the ReLU is identity in eval mode.
        f = jnp.maximum(f, 0.0)
    inv = jax.lax.rsqrt(bnv_ref[...].astype(jnp.float32) + bn_eps)
    f = (f - bnm_ref[...].astype(jnp.float32)) * inv \
        * bng_ref[...].astype(jnp.float32) + bnb_ref[...].astype(jnp.float32)
    feat_ref[...] = f.astype(feat_ref.dtype)

    logits = jnp.dot(f.astype(fw_ref.dtype), fw_ref[...],
                     preferred_element_type=jnp.float32) \
        + fb_ref[...].astype(jnp.float32)
    logit_ref[...] = logits.astype(logit_ref.dtype)


def classifier_head(x, p, *, drop_nl):
    B, D = x.shape
    bneck = p["bneck_w"].shape[1]
    ncls = p["fc_w"].shape[1]
    tb = B if B <= 512 else 512
    kernel = functools.partial(_head_kernel, ln_eps=1e-6, bn_eps=1e-5,
                               relu=(drop_nl == 1))
    row = lambda i: (i, 0)
    vec = lambda i: (0, 0)
    return pl.pallas_call(
        kernel,
        out_shape=(jax.ShapeDtypeStruct((B, bneck), jnp.float32),
                   jax.ShapeDtypeStruct((B, ncls), jnp.float32)),
        grid=(pl.cdiv(B, tb),),
        in_specs=[
            pl.BlockSpec((tb, D), row),
            pl.BlockSpec((1, D), vec), pl.BlockSpec((1, D), vec),
            pl.BlockSpec((D, bneck), vec), pl.BlockSpec((1, bneck), vec),
            pl.BlockSpec((1, bneck), vec), pl.BlockSpec((1, bneck), vec),
            pl.BlockSpec((1, bneck), vec), pl.BlockSpec((1, bneck), vec),
            pl.BlockSpec((bneck, ncls), vec), pl.BlockSpec((1, ncls), vec),
        ],
        out_specs=(pl.BlockSpec((tb, bneck), row),
                   pl.BlockSpec((tb, ncls), row)),
        compiler_params=pltpu.CompilerParams(dimension_semantics=("parallel",)),
    )(x, p["ln_f_g"].reshape(1, D), p["ln_f_b"].reshape(1, D),
      p["bneck_w"], p["bneck_b"].reshape(1, bneck),
      p["bn_g"].reshape(1, bneck), p["bn_b"].reshape(1, bneck),
      p["bn_m"].reshape(1, bneck), p["bn_v"].reshape(1, bneck),
      p["fc_w"], p["fc_b"].reshape(1, ncls))


# ----------------------------------------------------------------------------
# Parameter init (deterministic, synthetic; shapes follow the module __init__).
# Matmul weights in bf16 (MXU operands); LN/BN/bias params in f32.
# ----------------------------------------------------------------------------
def init_params(key, *, C, P, D, heads, n_layers, mlp_dim, n_patches,
                bottleneck_dim, num_classes, dtype=jnp.bfloat16):
    del heads  # static config, not stored in the (traced) param pytree

    def nrm(k, shape, std=0.02, dt=jnp.float32):
        return (jax.random.normal(k, shape, jnp.float32) * std).astype(dt)

    keys = iter(jax.random.split(key, 16 + 12 * n_layers))
    params = {
        # Conv2d(C, D, P, P) weight flattened to (C*P*P, D) for x @ W
        "patch_w": nrm(next(keys), (C * P * P, D), dt=dtype),
        "patch_b": jnp.zeros((D,), jnp.float32),
        "cls_token": nrm(next(keys), (1, 1, D), dt=dtype),
        "pos_emb": nrm(next(keys), (1, n_patches + 1, D), dt=dtype),
        "ln_f_g": jnp.ones((D,), jnp.float32),
        "ln_f_b": jnp.zeros((D,), jnp.float32),
        "layers": [],
        # bottleneck: Linear(D, bottleneck_dim) + BatchNorm1d(bottleneck_dim)
        "bneck_w": nrm(next(keys), (D, bottleneck_dim), dt=dtype),
        "bneck_b": nrm(next(keys), (bottleneck_dim,)),
        "bn_g": 1.0 + nrm(next(keys), (bottleneck_dim,)),
        "bn_b": nrm(next(keys), (bottleneck_dim,)),
        "bn_m": nrm(next(keys), (bottleneck_dim,)),
        "bn_v": 1.0 + jnp.abs(nrm(next(keys), (bottleneck_dim,))),
        # fc: Linear(bottleneck_dim, num_classes); weight_norm_dim=-1 => plain
        "fc_w": nrm(next(keys), (bottleneck_dim, num_classes), dt=dtype),
        "fc_b": nrm(next(keys), (num_classes,)),
    }
    for _ in range(n_layers):
        params["layers"].append({
            "ln1_g": jnp.ones((D,), jnp.float32),
            "ln1_b": jnp.zeros((D,), jnp.float32),
            "qkv_w": nrm(next(keys), (D, 3 * D), dt=dtype),   # in_proj.T
            "qkv_b": nrm(next(keys), (3 * D,)),
            "out_w": nrm(next(keys), (D, D), dt=dtype),       # out_proj.T
            "out_b": nrm(next(keys), (D,)),
            "ln2_g": jnp.ones((D,), jnp.float32),
            "ln2_b": jnp.zeros((D,), jnp.float32),
            "mlp_w1": nrm(next(keys), (D, mlp_dim), dt=dtype),
            "mlp_b1": nrm(next(keys), (mlp_dim,)),
            "mlp_w2": nrm(next(keys), (mlp_dim, D), dt=dtype),
            "mlp_b2": nrm(next(keys), (D,)),
        })
    return params


# ----------------------------------------------------------------------------
# Forward pass (eval mode): encoder -> cls token -> bottleneck+BN -> fc.
# `patch` / `heads` / `drop_nl` are static Python config (NOT traced leaves).
# ----------------------------------------------------------------------------
def vit_classifier_forward(params, x, *, patch, heads, drop_nl=0,
                           return_feats=False, compute_dtype=jnp.bfloat16):
    B, C, H, W = x.shape
    P = patch
    D = params["patch_w"].shape[1]
    nH, nW = H // P, W // P
    N = nH * nW
    S = N + 1

    x = x.astype(compute_dtype)
    # --- patch embedding: Conv2d(C, D, P, stride=P) == patch-extract + matmul
    # TODO(synk): the patch-extraction permute is materialized by XLA; folding
    # it into the patch-embed BlockSpec would save one HBM round trip of x.
    patches = x.reshape(B, C, nH, P, nW, P)
    patches = patches.transpose(0, 2, 4, 1, 3, 5).reshape(B * N, C * P * P)
    tokens = fused_linear(patches, params["patch_w"], params["patch_b"])
    tokens = tokens.reshape(B, N, D)

    # --- class token + positional embedding (one fused Pallas kernel) ---
    # TODO(synk): encoder-level Dropout is identity in eval mode (omitted).
    seq = assemble_sequence(tokens, params["cls_token"], params["pos_emb"])
    seq = seq.reshape(B * S, D)

    # --- transformer encoder layers ---
    for lp in params["layers"]:
        # LN1 fused as prologue of the qkv projection (one tiled kernel)
        qkv = fused_linear(seq, lp["qkv_w"], lp["qkv_b"],
                           ln=(lp["ln1_g"], lp["ln1_b"]))        # (B*S, 3D)
        # attention straight from packed qkv; lane-dense head-concat output
        attn = multihead_attention(qkv.reshape(B, S, 3 * D), heads)
        # out-projection with residual add fused into the epilogue
        seq = fused_linear(attn.reshape(B * S, D), lp["out_w"], lp["out_b"],
                           residual=seq)
        # MLP: LN2 + bias + exact GELU fused into w1; residual fused into w2
        h = fused_linear(seq, lp["mlp_w1"], lp["mlp_b1"],
                         ln=(lp["ln2_g"], lp["ln2_b"]), activation="gelu")
        seq = fused_linear(h, lp["mlp_w2"], lp["mlp_b2"], residual=seq)

    # final LayerNorm is row-wise, so LN(all tokens)[:, 0] == LN(cls row);
    # it is fused into the classifier-head kernel below.
    cls_tok = seq.reshape(B, S, D)[:, 0]                          # (B, D)
    # torch.flatten(feat, 1) is a no-op on a (B, D) tensor.
    feat, logits = classifier_head(cls_tok, params, drop_nl=drop_nl)
    if return_feats:
        return feat, logits
    return logits


# ----------------------------------------------------------------------------
if __name__ == "__main__":
    root = jax.random.PRNGKey(0)
    k_x, k_p, k_a, k_b, k_c = jax.random.split(root, 5)

    # ---- small numerical probes of the fused-linear paths (incl. ragged M,
    #      K-tiled accumulator, and the cached-LN prologue across N tiles) ----
    xa = (jax.random.normal(k_a, (70, 256), jnp.float32) * 0.5).astype(jnp.bfloat16)
    wa = (jax.random.normal(k_b, (256, 384), jnp.float32) * 0.05).astype(jnp.bfloat16)
    ba = jax.random.normal(k_c, (384,), jnp.float32) * 0.1
    xf, wf = xa.astype(jnp.float32), wa.astype(jnp.float32)
    ref_plain = jnp.dot(xf, wf, precision=jax.lax.Precision.HIGHEST) + ba
    got_kk = fused_linear(xa, wa, ba, out_dtype=jnp.float32, tm=32, tn=128, tk=128)
    got_1k = fused_linear(xa, wa, ba, out_dtype=jnp.float32, tm=32, tn=128)
    mu = xf.mean(-1, keepdims=True)
    var = ((xf - mu) ** 2).mean(-1, keepdims=True)
    xn = ((xf - mu) * jax.lax.rsqrt(var + 1e-6)).astype(jnp.bfloat16).astype(jnp.float32)
    ref_ln = jnp.dot(xn, wf, precision=jax.lax.Precision.HIGHEST) + ba
    got_ln = fused_linear(xa, wa, ba, ln=(jnp.ones((256,)), jnp.zeros((256,))),
                          out_dtype=jnp.float32, tm=32, tn=128)
    for name, got, ref in (("kk", got_kk, ref_plain), ("1k", got_1k, ref_plain),
                           ("ln", got_ln, ref_ln)):
        ok = bool(jnp.allclose(got, ref, atol=0.2, rtol=0.1))
        assert ok, (name, float(jnp.max(jnp.abs(got - ref))))

    # ---- small synthetic ViT: 16x16 image, 3 channels, patch 8 -> 4 patches ----
    B, C, H, W = 2, 3, 16, 16
    P, D, HEADS, LAYERS, MLP = 8, 32, 2, 2, 64
    BOTTLENECK, NUM_CLASSES = 32, 10

    x = jax.random.normal(k_x, (B, C, H, W), jnp.float32)
    params = init_params(
        k_p, C=C, P=P, D=D, heads=HEADS, n_layers=LAYERS, mlp_dim=MLP,
        n_patches=(H // P) * (W // P), bottleneck_dim=BOTTLENECK,
        num_classes=NUM_CLASSES, dtype=jnp.bfloat16)

    fwd = jax.jit(functools.partial(vit_classifier_forward,
                                    patch=P, heads=HEADS, drop_nl=0))
    logits = fwd(params, x)
    jax.block_until_ready(logits)
    assert logits.shape == (B, NUM_CLASSES) and logits.dtype == jnp.float32
    assert bool(jnp.all(jnp.isfinite(logits)))
    print("KERNEL_OK")
</pallas_src>

<mosaic_0001>
module attributes {stable_mosaic.version = 11 : i64} {
  func.func @_linear_kk_kernel(%arg0: i32, %arg1: i32, %arg2: i32, %arg3: memref<32x128xbf16, #tpu.memory_space<vmem>>, %arg4: memref<128x128xbf16, #tpu.memory_space<vmem>>, %arg5: memref<1x128xf32, #tpu.memory_space<vmem>>, %arg6: memref<32x128xf32, #tpu.memory_space<vmem>>, %arg7: memref<32x128xf32, #tpu.memory_space<vmem>>) attributes {dimension_semantics = [#tpu.dimension_semantics<parallel>, #tpu.dimension_semantics<parallel>, #tpu.dimension_semantics<arbitrary>], iteration_bounds = array<i64: 3, 3, 2>, scalar_prefetch = 0 : i64, scratch_operands = 1 : i64, tpu.core_type = #tpu.core_type<tc>, window_params = [{transform_indices = @transform_0, window_bounds = array<i64: 32, 128>}, {transform_indices = @transform_1, window_bounds = array<i64: 128, 128>}, {transform_indices = @transform_2, window_bounds = array<i64: 1, 128>}, {transform_indices = @transform_3, window_bounds = array<i64: 32, 128>}]} {
    %c0_i32 = arith.constant 0 : i32
    %0 = arith.cmpi eq, %arg2, %c0_i32 : i32
    %1 = arith.extui %0 : i1 to i32
    %c0_i32_0 = arith.constant 0 : i32
    %2 = arith.cmpi ne, %1, %c0_i32_0 : i32
    scf.if %2 {
      %cst_9 = arith.constant 0.000000e+00 : f32
      %12 = vector.broadcast %cst_9 : f32 to vector<32x128xf32>
      %c0_10 = arith.constant 0 : index
      %c0_11 = arith.constant 0 : index
      %13 = vector.load %arg7[%c0_10, %c0_11] : memref<32x128xf32, #tpu.memory_space<vmem>>, vector<32x128xf32>
      tpu.vector_store %arg7[%c0_10, %c0_11], %12 {strides = array<i32>} : memref<32x128xf32, #tpu.memory_space<vmem>>, vector<32x128xf32>,
    } else {
    }
    %c0 = arith.constant 0 : index
    %c0_1 = arith.constant 0 : index
    %3 = vector.load %arg7[%c0, %c0_1] : memref<32x128xf32, #tpu.memory_space<vmem>>, vector<32x128xf32>
    %c0_2 = arith.constant 0 : index
    %c0_3 = arith.constant 0 : index
    %4 = vector.load %arg3[%c0_2, %c0_3] : memref<32x128xbf16, #tpu.memory_space<vmem>>, vector<32x128xbf16>
    %c0_4 = arith.constant 0 : index
    %c0_5 = arith.constant 0 : index
    %5 = vector.load %arg4[%c0_4, %c0_5] : memref<128x128xbf16, #tpu.memory_space<vmem>>, vector<128x128xbf16>
    %cst = arith.constant dense<0.000000e+00> : vector<32x128xf32>
    %6 = tpu.matmul %4, %5, %cst {dimension_numbers = #tpu.dot_dimension_numbers<[1], [0], [0], [1], [0, 0, 1, 1], [], []>} : vector<32x128xbf16>, vector<128x128xbf16>, vector<32x128xf32> -> vector<32x128xf32>
    %7 = arith.addf %3, %6 : vector<32x128xf32>
    %c0_6 = arith.constant 0 : index
    %c0_7 = arith.constant 0 : index
    %8 = vector.load %arg7[%c0_6, %c0_7] : memref<32x128xf32, #tpu.memory_space<vmem>>, vector<32x128xf32>
    tpu.vector_store %arg7[%c0_6, %c0_7], %7 {strides = array<i32>} : memref<32x128xf32, #tpu.memory_space<vmem>>, vector<32x128xf32>,
    %c1_i32 = arith.constant 1 : i32
    %9 = arith.cmpi eq, %arg2, %c1_i32 : i32
    %10 = arith.extui %9 : i1 to i32
    %c0_i32_8 = arith.constant 0 : i32
    %11 = arith.cmpi ne, %10, %c0_i32_8 : i32
    scf.if %11 {
      %c0_9 = arith.constant 0 : index
      %c0_10 = arith.constant 0 : index
      %12 = vector.load %arg7[%c0_9, %c0_10] : memref<32x128xf32, #tpu.memory_space<vmem>>, vector<32x128xf32>
      %c0_11 = arith.constant 0 : index
      %c0_12 = arith.constant 0 : index
      %13 = vector.load %arg5[%c0_11, %c0_12] : memref<1x128xf32, #tpu.memory_space<vmem>>, vector<1x128xf32>
      %14 = vector.broadcast %13 : vector<1x128xf32> to vector<32x128xf32>
      %15 = arith.addf %12, %14 : vector<32x128xf32>
      %c0_13 = arith.constant 0 : index
      %c0_14 = arith.constant 0 : index
      %16 = vector.load %arg6[%c0_13, %c0_14] : memref<32x128xf32, #tpu.memory_space<vmem>>, vector<32x128xf32>
      tpu.vector_store %arg6[%c0_13, %c0_14], %15 {strides = array<i32>} : memref<32x128xf32, #tpu.memory_space<vmem>>, vector<32x128xf32>,
    } else {
    }
    return
  }
  func.func @transform_0(%arg0: i32, %arg1: i32, %arg2: i32) -> (i32, i32) {
    %c0_i32 = arith.constant 0 : i32
    return %arg0, %arg2 : i32, i32
  }
  func.func @transform_1(%arg0: i32, %arg1: i32, %arg2: i32) -> (i32, i32) {
    %c0_i32 = arith.constant 0 : i32
    return %arg2, %arg1 : i32, i32
  }
  func.func @transform_2(%arg0: i32, %arg1: i32, %arg2: i32) -> (i32, i32) {
    %c0_i32 = arith.constant 0 : i32
    %c0_i32_0 = arith.constant 0 : i32
    return %c0_i32, %arg1 : i32, i32
  }
  func.func @transform_3(%arg0: i32, %arg1: i32, %arg2: i32) -> (i32, i32) {
    %c0_i32 = arith.constant 0 : i32
    return %arg0, %arg1 : i32, i32
  }
}

</mosaic_0001>

<llo_original>
// kernel: tpu_custom_call.1
$region0: #{tpu_custom_call.1}
  #allocation0 [shape = 'u32[]', space=smem, size = 0x4, offset = 0x4, fixed_abs, tag = 'smem constant byte address 0x4 - core index']
  #allocation1 [shape = 'u32[144,128]{1,0:T(1,128)}', space=vmem, size = 0x12000, scoped, tag = 'internal scratch']
  #allocation2 [shape = 'f32[32,128]{1,0:T(8,128)}', space=vmem, size = 0x4000, scoped, tag = 'scratch operand']
  %s0 = inlined_call_operand.hbm [shape: bf16[70,256], index: 0, kind: input, shape index: {}]
  %s1 = inlined_call_operand.hbm [shape: bf16[256,384], index: 1, kind: input, shape index: {}]
  %s2 = inlined_call_operand.vmem [shape: f32[1,384], index: 2, kind: input, shape index: {}]
  %s3 = inlined_call_operand.hbm [shape: f32[70,384], index: 3, kind: output, shape index: {}]
  %s4 = sld [smem:[#allocation0]]
  $region61: #{tpu_custom_call.1} parent=0
    _
  %s6 = ssub.s32 1, %s4
  %s7 = scalar_select 0, %s6, %s4
  $region1: #{tpu_custom_call.1} parent=0
    #allocation3 [shape = 'u8[16384]{0}', space=vmem, size = 0x4000, scoped, tag = 'input window, operand 0']
    #allocation4 [shape = 's32[2]{0}', space=sflag, size = 0x8, scoped, tag = 'scoped memory for tpu_custom_call.1']
    #allocation5 [shape = 's32[2]{0}', space=sflag, size = 0x8, scoped, tag = 'scoped memory for tpu_custom_call.1']
    #allocation6 [shape = 'u8[65536]{0}', space=vmem, size = 0x10000, scoped, tag = 'input window, operand 1']
    #allocation7 [shape = 's32[2]{0}', space=sflag, size = 0x8, scoped, tag = 'scoped memory for tpu_custom_call.1']
    #allocation8 [shape = 'u8[32768]{0}', space=vmem, size = 0x8000, scoped, tag = 'output window, operand 0']
    %8 = vsyncpa [#allocation4], 0
    %s9 = scalar_lea.sflag [#allocation4], 1
    %10 = vsyncpa %s9, 0
    %11 = vsyncpa [#allocation7], 0
    %s12 = scalar_lea.sflag [#allocation7], 1
    %13 = vsyncpa %s12, 0
    %14 = vsyncpa [#allocation5], 0
    %s15 = scalar_lea.sflag [#allocation5], 1
    %16 = vsyncpa %s15, 0
    loop: start=0, step=1, limit=20
    $region2: #{tpu_custom_call.1} parent=1 // loop_pre_header
      _
    $region3: #{tpu_custom_call.1} parent=1 // loop_header
      %s18 = sphi 0, %s22
      %p19 = scmp.ge.s32.totalorder %s18, 20
      %s25 = sphi 0, %s44
      %s26 = sphi 0, %s40
      %s27 = sphi 0, %s36
      %s28 = sphi 0, %s25
      %s29 = sphi 0, %s26
      %s30 = sphi 0, %s27
      %s31 = sphi 0, %s28
      %s32 = sphi 0, %s29
      %s33 = sphi 0, %s30
      %s49 = sphi 0, %s51
      %s52 = sphi 0, %s49
      %s53 = sphi 0, %s52
      %s69 = sphi 0, %s53
      %s77 = sphi 0, %s79
      %s80 = sphi 0, %s77
      %s81 = sphi 0, %s80
      %s97 = sphi 0, %s81
      %s103 = sphi 0, %s105
      %s106 = sphi 0, %s103
      %s107 = sphi 0, %s106
      %s123 = sphi 0, %s107
      %s131 = sphi 0, %s133
      %s134 = sphi 0, %s131
      %s135 = sphi 0, %s134
      %s151 = sphi 0, %s135
    $region4: #{tpu_custom_call.1} parent=1 // loop_header_branch
      %21 = sbr.rel (%p19) target = $region8
    $region5: #{tpu_custom_call.1} parent=1 // loop_body
      %s23 = ssub.s32 %s18, 1
      %s24 = ssub.s32 %s18, 2
      %s34 = sadd.s32 1, %s27
      %p35 = scmp.ge.s32.totalorder %s34, 2
      %s36 = scalar_select %p35, 0, %s34
      %s37 = sadd.s32 1, %s26
      %s38 = scalar_select %p35, %s37, %s26
      %p39 = scmp.ge.s32.totalorder %s38, 3
      %s40 = scalar_select %p39, 0, %s38
      %s41 = sadd.s32 1, %s25
      %s42 = scalar_select %p39, %s41, %s25
      %p43 = scmp.ge.s32.totalorder %s42, 3
      %s44 = scalar_select %p43, 0, %s42
      %s45 = ssub.s32 %s25, %s44
      %s46 = ssub.s32 %s27, %s36
      %s47 = sor.u32 %s45, %s46
      %p48 = scmp.eq.s32.totalorder %s47, 0
      %s50 = sadd.s32 %s49, 1
      %s51 = scalar_select %p48, %s49, %s50
      %p54 = pneg %p48
      %p55 = scmp.eq.s32.totalorder %s18, 17
      %p56 = por %p54, %p55
      %p57 = scmp.ne.s32.totalorder %s49, %s52
      %p58 = scmp.eq.s32.totalorder %s18, 0
      %p59 = por %p57, %p58
      %p60 = scmp.ne.s32.totalorder %s49, %s52
      %p61 = scmp.eq.s32.totalorder %s23, 17
      %p62 = por %p60, %p61
      %p63 = scmp.ne.s32.totalorder %s52, %s53
      %p64 = scmp.eq.s32.totalorder %s23, 0
      %p65 = por %p63, %p64
      %p66 = scmp.ne.s32.totalorder %s52, %s53
      %p67 = scmp.eq.s32.totalorder %s24, 17
      %p68 = por %p66, %p67
      %p70 = scmp.ne.s32.totalorder %s53, %s69
      %p71 = scmp.eq.s32.totalorder %s24, 0
      %p72 = por %p70, %p71
      %s73 = ssub.s32 %s27, %s36
      %s74 = ssub.s32 %s26, %s40
      %s75 = sor.u32 %s73, %s74
      %p76 = scmp.eq.s32.totalorder %s75, 0
      %s78 = sadd.s32 %s77, 1
      %s79 = scalar_select %p76, %s77, %s78
      %p82 = pneg %p76
      %p83 = scmp.eq.s32.totalorder %s18, 17
      %p84 = por %p82, %p83
      %p85 = scmp.ne.s32.totalorder %s77, %s80
      %p86 = scmp.eq.s32.totalorder %s18, 0
      %p87 = por %p85, %p86
      %p88 = scmp.ne.s32.totalorder %s77, %s80
      %p89 = scmp.eq.s32.totalorder %s23, 17
      %p90 = por %p88, %p89
      %p91 = scmp.ne.s32.totalorder %s80, %s81
      %p92 = scmp.eq.s32.totalorder %s23, 0
      %p93 = por %p91, %p92
      %p94 = scmp.ne.s32.totalorder %s80, %s81
      %p95 = scmp.eq.s32.totalorder %s24, 17
      %p96 = por %p94, %p95
      %p98 = scmp.ne.s32.totalorder %s81, %s97
      %p99 = scmp.eq.s32.totalorder %s24, 0
      %p100 = por %p98, %p99
      %s101 = ssub.s32 %s26, %s40
      %p102 = scmp.eq.s32.totalorder %s101, 0
      %s104 = sadd.s32 %s103, 1
      %s105 = scalar_select %p102, %s103, %s104
      %p108 = pneg %p102
      %p109 = scmp.eq.s32.totalorder %s18, 17
      %p110 = por %p108, %p109
      %p111 = scmp.ne.s32.totalorder %s103, %s106
      %p112 = scmp.eq.s32.totalorder %s18, 0
      %p113 = por %p111, %p112
      %p114 = scmp.ne.s32.totalorder %s103, %s106
      %p115 = scmp.eq.s32.totalorder %s23, 17
      %p116 = por %p114, %p115
      %p117 = scmp.ne.s32.totalorder %s106, %s107
      %p118 = scmp.eq.s32.totalorder %s23, 0
      %p119 = por %p117, %p118
      %p120 = scmp.ne.s32.totalorder %s106, %s107
      %p121 = scmp.eq.s32.totalorder %s24, 17
      %p122 = por %p120, %p121
      %p124 = scmp.ne.s32.totalorder %s107, %s123
      %p125 = scmp.eq.s32.totalorder %s24, 0
      %p126 = por %p124, %p125
      %s127 = ssub.s32 %s25, %s44
      %s128 = ssub.s32 %s26, %s40
      %s129 = sor.u32 %s127, %s128
      %p130 = scmp.eq.s32.totalorder %s129, 0
      %s132 = sadd.s32 %s131, 1
      %s133 = scalar_select %p130, %s131, %s132
      %p136 = pneg %p130
      %p137 = scmp.eq.s32.totalorder %s18, 17
      %p138 = por %p136, %p137
      %p139 = scmp.ne.s32.totalorder %s131, %s134
      %p140 = scmp.eq.s32.totalorder %s18, 0
      %p141 = por %p139, %p140
      %p142 = scmp.ne.s32.totalorder %s131, %s134
      %p143 = scmp.eq.s32.totalorder %s23, 17
      %p144 = por %p142, %p143
      %p145 = scmp.ne.s32.totalorder %s134, %s135
      %p146 = scmp.eq.s32.totalorder %s23, 0
      %p147 = por %p145, %p146
      %p148 = scmp.ne.s32.totalorder %s134, %s135
      %p149 = scmp.eq.s32.totalorder %s24, 17
      %p150 = por %p148, %p149
      %p152 = scmp.ne.s32.totalorder %s135, %s151
      %p153 = scmp.eq.s32.totalorder %s24, 0
      %p154 = por %p152, %p153
      %p155 = scmp.le.s32.totalorder 1, %s18
      %p156 = scmp.lt.s32.totalorder %s18, 19
      %p157 = pnand %p155, %p156
      %p158 = pneg %p157
      // Predicated region
      $region9: #{tpu_custom_call.1} parent=5 // pred_check
        _
      $region10: #{tpu_custom_call.1} parent=5 // pred_check_branch
        %160 = sbr.rel (%p157) target = $region12
      $region11: #{tpu_custom_call.1} parent=5 // pred_region
        %s161 = ssub.s32 %s18, 1
      $region12: #{tpu_custom_call.1} parent=5 // pred_fallthru
        _
      %p162 = scmp.lt.s32.totalorder %s18, 18
      // Predicated region
      $region13: #{tpu_custom_call.1} parent=5 // pred_check
        %p163 = pneg %p162
      $region14: #{tpu_custom_call.1} parent=5 // pred_check_branch
        %165 = sbr.rel (%p163) target = $region16
      $region15: #{tpu_custom_call.1} parent=5 // pred_region
        // Predicated region
        $region17: #{tpu_custom_call.1} parent=15 // pred_check
          %p166 = pneg %p59
        $region18: #{tpu_custom_call.1} parent=15 // pred_check_branch
          %168 = sbr.rel (%p166) target = $region20
        $region19: #{tpu_custom_call.1} parent=15 // pred_region
          %s169 = sand.u32 %s49, 1
          %s170 = scalar_lea.sflag [#allocation4], %s169
          %s171 = sand.u32 %s49, 1
          %s172 = smul.addr %s171, 16
          %s173 = scalar_lea.vmem [#allocation3], %s172
          %s174 = smul.u32 4, %s25
          %s175 = ssub.s32 9, %s174
          %p176 = scmp.lt.s32.totalorder %s175, 4
          %s177 = scalar_select %p176, %s175, 4
          %s178 = smul.u32 64, %s177
          %s180 = ssub.s32 256, %s178
          %181 = vsyncadd %s170, %s180
          %p182 = scmp.ne.s32.totalorder 0, %s178
          %s183 = smul.addr %s174, 2
          %s184 = sadd.s32 %s27, %s183
          %s185 = smul.addr %s184, 64
          %s186 = scalar_lea.hbm %s0, %s185
          %s187 = smul.u32 4, %s177
          %s188 = sshll.u32 %s173, 4
          %s189 = int_to_ptr.vmem [resolvable:$true] %s188
          %s190 = sshll.u32 %s187, 4
          %194 = dma.hbm_to_vmem [thread:$0]  (%p182), %s186, %s190, %s189, %s170, 128, 64, 4
        $region20: #{tpu_custom_call.1} parent=15 // pred_fallthru
          _
        // Predicated region
        $region21: #{tpu_custom_call.1} parent=15 // pred_check
          %p195 = pneg %p87
        $region22: #{tpu_custom_call.1} parent=15 // pred_check_branch
          %197 = sbr.rel (%p195) target = $region24
        $region23: #{tpu_custom_call.1} parent=15 // pred_region
          %s198 = sand.u32 %s77, 1
          %s199 = scalar_lea.sflag [#allocation7], %s198
          %s200 = sand.u32 %s77, 1
          %s201 = smul.addr %s200, 64
          %s202 = scalar_lea.vmem [#allocation6], %s201
          %s203 = smul.u32 16, %s27
          %s205 = ssub.s32 1024, 1024
          %206 = vsyncadd %s199, %s205
          %s207 = smul.addr %s203, 3
          %s208 = sadd.s32 %s26, %s207
          %s209 = smul.addr %s208, 64
          %s210 = scalar_lea.hbm %s1, %s209
          %s211 = sshll.u32 %s202, 4
          %s212 = int_to_ptr.vmem [resolvable:$true] %s211
          %217 = dma.hbm_to_vmem [thread:$0]  %s210, 1024, %s212, %s199, 192, 64, 4
        $region24: #{tpu_custom_call.1} parent=15 // pred_fallthru
          _
        // Predicated region
        $region25: #{tpu_custom_call.1} parent=15 // pred_check
          %p218 = pneg %p113
        $region26: #{tpu_custom_call.1} parent=15 // pred_check_branch
          %220 = sbr.rel (%p218) target = $region28
        $region27: #{tpu_custom_call.1} parent=15 // pred_region
          %p221 = scmp.lt.s32.totalorder %s26, 2
          %s222 = scalar_select %p221, %s26, 2
          %s223 = scalar_lea.vmem %s2, %s222
        $region28: #{tpu_custom_call.1} parent=15 // pred_fallthru
          _
      $region16: #{tpu_custom_call.1} parent=5 // pred_fallthru
        _
      %p224 = scmp.le.s32.totalorder 1, %s18
      %p225 = scmp.lt.s32.totalorder %s18, 19
      %p226 = pnand %p224, %p225
      %p227 = pneg %p226
      // Predicated region
      $region29: #{tpu_custom_call.1} parent=5 // pred_check
        _
      $region30: #{tpu_custom_call.1} parent=5 // pred_check_branch
        %229 = sbr.rel (%p226) target = $region32
      $region31: #{tpu_custom_call.1} parent=5 // pred_region
        %s230 = ssub.s32 %s18, 1
        %s231 = sand.u32 %s52, 1
        %s232 = scalar_lea.sflag [#allocation4], %s231
        %s233 = sand.u32 %s52, 1
        %s234 = smul.addr %s233, 16
        %s235 = scalar_lea.vmem [#allocation3], %s234
        // Predicated region
        $region33: #{tpu_custom_call.1} parent=31 // pred_check
          %p236 = pneg %p65
        $region34: #{tpu_custom_call.1} parent=31 // pred_check_branch
          %238 = sbr.rel (%p236) target = $region36
        $region35: #{tpu_custom_call.1} parent=31 // pred_region
          %239 = dma.done %s232, 256
        $region36: #{tpu_custom_call.1} parent=31 // pred_fallthru
          _
        %s240 = sand.u32 %s80, 1
        %s241 = scalar_lea.sflag [#allocation7], %s240
        %s242 = sand.u32 %s80, 1
        %s243 = smul.addr %s242, 64
        %s244 = scalar_lea.vmem [#allocation6], %s243
        // Predicated region
        $region37: #{tpu_custom_call.1} parent=31 // pred_check
          %p245 = pneg %p93
        $region38: #{tpu_custom_call.1} parent=31 // pred_check_branch
          %247 = sbr.rel (%p245) target = $region40
        $region39: #{tpu_custom_call.1} parent=31 // pred_region
          %248 = dma.done %s241, 1024
        $region40: #{tpu_custom_call.1} parent=31 // pred_fallthru
          _
        %s249 = sand.u32 %s52, 1
        %s250 = scalar_lea.sflag [#allocation4], %s249
        %s251 = sand.u32 %s52, 1
        %s252 = smul.addr %s251, 16
        %s253 = scalar_lea.vmem [#allocation3], %s252
        %p254 = pneg %p65
        %p255 = pneg %p62
        %s256 = sand.u32 %s80, 1
        %s257 = scalar_lea.sflag [#allocation7], %s256
        %s258 = sand.u32 %s80, 1
        %s259 = smul.addr %s258, 64
        %s260 = scalar_lea.vmem [#allocation6], %s259
        %p261 = pneg %p93
        %p262 = pneg %p90
        %p263 = scmp.lt.s32.totalorder %s29, 2
        %s264 = scalar_select %p263, %s29, 2
        %s265 = scalar_lea.vmem %s2, %s264
        %p266 = pneg %p119
        %p267 = pneg %p116
        %p268 = pneg %p147
        %p269 = pneg %p144
        %s270 = sand.u32 %s134, 1
        %s271 = scalar_lea.sflag [#allocation5], %s270
        %s272 = sand.u32 %s134, 1
        %s273 = smul.addr %s272, 32
        %s274 = scalar_lea.vmem [#allocation8], %s273
        %s275 = smul.u32 4, %s28
        %s276 = ssub.s32 9, %s275
        %p277 = scmp.lt.s32.totalorder %s276, 4
        %s278 = scalar_select %p277, %s276, 4
        %s279 = smul.u32 64, %s278
        %s280 = smul.u32 16, %s30
        %p281 = scmp.lt.s32.totalorder %s29, 2
        %s282 = scalar_select %p281, %s29, 2
        %s283 = scalar_lea.vmem %s2, %s282
        %s284 = smul.u32 4, %s28
        %s285 = ssub.s32 9, %s284
        %p286 = scmp.lt.s32.totalorder %s285, 4
        %s287 = scalar_select %p286, %s285, 4
        %s288 = smul.u32 128, %s287
        %p290 = scmp.eq.s32.totalorder %s30, 0
        // Predicated region
        $region41: #{tpu_custom_call.1} parent=31 // pred_check
          %p291 = pneg %p290
        $region42: #{tpu_custom_call.1} parent=31 // pred_check_branch
          %293 = sbr.rel (%p291) target = $region44
        $region43: #{tpu_custom_call.1} parent=31 // pred_region
          %294 = vst [vmem:[#allocation2] sm:$0xff] 0.0
          %295 = vst [vmem:[#allocation2 + $0x8] sm:$0xff] 0.0
          %296 = vst [vmem:[#allocation2 + $0x10] sm:$0xff] 0.0
          %297 = vst [vmem:[#allocation2 + $0x18] sm:$0xff] 0.0
        $region44: #{tpu_custom_call.1} parent=31 // pred_fallthru
          _
        %v298 = vld [vmem:[#allocation2] sm:$0xff]
        %v299 = vld [vmem:[#allocation2 + $0x8] sm:$0xff]
        %v300 = vld [vmem:[#allocation2 + $0x10] sm:$0xff]
        %v301 = vld [vmem:[#allocation2 + $0x18] sm:$0xff]
        %v302 = vld [vmem:[%s235] sm:$0xf]
        %v303 = vld [vmem:[%s235 + $0x4] sm:$0xf]
        %v304 = vld [vmem:[%s235 + $0x8] sm:$0xf]
        %v305 = vld [vmem:[%s235 + $0xc] sm:$0xf]
        %v306 = vld [vmem:[%s244] sm:$0xf]
        %v307 = vld [vmem:[%s244 + $0x4] sm:$0xf]
        %v308 = vld [vmem:[%s244 + $0x8] sm:$0xf]
        %v309 = vld [vmem:[%s244 + $0xc] sm:$0xf]
        %v310 = vld [vmem:[%s244 + $0x10] sm:$0xf]
        %v311 = vld [vmem:[%s244 + $0x14] sm:$0xf]
        %v312 = vld [vmem:[%s244 + $0x18] sm:$0xf]
        %v313 = vld [vmem:[%s244 + $0x1c] sm:$0xf]
        %v314 = vld [vmem:[%s244 + $0x20] sm:$0xf]
        %v315 = vld [vmem:[%s244 + $0x24] sm:$0xf]
        %v316 = vld [vmem:[%s244 + $0x28] sm:$0xf]
        %v317 = vld [vmem:[%s244 + $0x2c] sm:$0xf]
        %v318 = vld [vmem:[%s244 + $0x30] sm:$0xf]
        %v319 = vld [vmem:[%s244 + $0x34] sm:$0xf]
        %v320 = vld [vmem:[%s244 + $0x38] sm:$0xf]
        %v321 = vld [vmem:[%s244 + $0x3c] sm:$0xf]
        %v326 = vunpack.c.l.b16 %v302
        %v327 = vunpack.c.l.b16 %v303
        %v328 = vunpack.c.l.b16 %v304
        %v329 = vunpack.c.l.b16 %v305
        %v330 = vpack.c.b16 %v327, %v326
        %v331 = vpack.c.b16 %v329, %v328
        %v350 = vunpack.c.l.b16 %v306
        %v351 = vunpack.c.l.b16 %v307
        %v352 = vunpack.c.l.b16 %v308
        %v353 = vunpack.c.l.b16 %v309
        %v354 = vunpack.c.l.b16 %v310
        %v355 = vunpack.c.l.b16 %v311
        %v356 = vunpack.c.l.b16 %v312
        %v357 = vunpack.c.l.b16 %v313
        %v358 = vunpack.c.l.b16 %v314
        %v359 = vunpack.c.l.b16 %v315
        %v360 = vunpack.c.l.b16 %v316
        %v361 = vunpack.c.l.b16 %v317
        %v362 = vunpack.c.l.b16 %v318
        %v363 = vunpack.c.l.b16 %v319
        %v364 = vunpack.c.l.b16 %v320
        %v365 = vunpack.c.l.b16 %v321
        %v366 = vpack.c.b16 %v351, %v350
        %v367 = vpack.c.b16 %v353, %v352
        %v368 = vpack.c.b16 %v355, %v354
        %v369 = vpack.c.b16 %v357, %v356
        %v370 = vpack.c.b16 %v359, %v358
        %v371 = vpack.c.b16 %v361, %v360
        %v372 = vpack.c.b16 %v363, %v362
        %v373 = vpack.c.b16 %v365, %v364
        %382 = vmatprep.subr.bf16.mxu0 0
        %383 = vmatpush1.bf16.msra.mxu0 %v366
        %384 = vmatprep.subr.bf16.mxu0 0
        %385 = vmatpush1.bf16.msra.mxu0 %v367
        %386 = vmatprep.subr.bf16.mxu0 0
        %387 = vmatpush1.bf16.msra.mxu0 %v368
        %388 = vmatprep.subr.bf16.mxu0 0
        %389 = vmatpush1.bf16.msra.mxu0 %v369
        %390 = vmatprep.subr.bf16.mxu0 0
        %391 = vmatpush1.bf16.msra.mxu0 %v370
        %392 = vmatprep.subr.bf16.mxu0 0
        %393 = vmatpush1.bf16.msra.mxu0 %v371
        %394 = vmatprep.subr.bf16.mxu0 0
        %395 = vmatpush1.bf16.msra.mxu0 %v372
        %396 = vmatprep.subr.bf16.mxu0 0
        %397 = vmatpush1.bf16.msra.mxu0 %v373
        %398 = vmatprep.subr.bf16.mxu0 0
        %399 = vmatpush1.bf16.msra.mxu0 0
        %400 = vmatprep.subr.bf16.mxu0 0
        %401 = vmatpush1.bf16.msra.mxu0 0
        %402 = vmatprep.subr.bf16.mxu0 0
        %403 = vmatpush1.bf16.msra.mxu0 0
        %404 = vmatprep.subr.bf16.mxu0 0
        %405 = vmatpush1.bf16.msra.mxu0 0
        %406 = vmatprep.subr.bf16.mxu0 0
        %407 = vmatpush1.bf16.msra.mxu0 0
        %408 = vmatprep.subr.bf16.mxu0 0
        %409 = vmatpush1.bf16.msra.mxu0 0
        %410 = vmatprep.subr.bf16.mxu0 0
        %411 = vmatpush1.bf16.msra.mxu0 0
        %412 = vmatprep.subr.bf16.mxu0 0
        %413 = vmatpush1.bf16.msra.mxu0 0
        %414 = vmatprep.mubr.bf16.mxu0 0
        %415 = vmatmul.mubr.bf16.gmra.mrb[0].mxu0 %v330
        %v416 = vpop.f32.mrb[0].mxu0
        %v417 = vadd.f32 0.0, %v416
        %v418 = vpop.f32.mrb[0].mxu0
        %v419 = vpop.f32.mrb[0].mxu0
        %v420 = vadd.f32 0.0, %v419
        %v421 = vpop.f32.mrb[0].mxu0
        %422 = vmatprep.mubr.bf16.mxu0 0
        %423 = vmatmul.mubr.bf16.gmra.mrb[0].mxu0 %v331
        %v424 = vpop.f32.mrb[0].mxu0
        %v425 = vadd.f32 0.0, %v424
        %v426 = vpop.f32.mrb[0].mxu0
        %v427 = vpop.f32.mrb[0].mxu0
        %v428 = vadd.f32 0.0, %v427
        %v429 = vpop.f32.mrb[0].mxu0
        %430 = vdwg.mxu0
        %v431 = vadd.f32 %v298, %v417
        %v432 = vadd.f32 %v299, %v420
        %v433 = vadd.f32 %v300, %v425
        %v434 = vadd.f32 %v301, %v428
        %435 = vst [vmem:[#allocation2] sm:$0xff] %v431
        %436 = vst [vmem:[#allocation2 + $0x8] sm:$0xff] %v432
        %437 = vst [vmem:[#allocation2 + $0x10] sm:$0xff] %v433
        %438 = vst [vmem:[#allocation2 + $0x18] sm:$0xff] %v434
        %p439 = scmp.eq.s32.totalorder %s30, 1
        // Predicated region
        $region45: #{tpu_custom_call.1} parent=31 // pred_check
          %p440 = pneg %p439
        $region46: #{tpu_custom_call.1} parent=31 // pred_check_branch
          %442 = sbr.rel (%p440) target = $region48
        $region47: #{tpu_custom_call.1} parent=31 // pred_region
          %v443 = vld [vmem:[#allocation2] sm:$0xff]
          %v444 = vld [vmem:[#allocation2 + $0x8] sm:$0xff]
          %v445 = vld [vmem:[#allocation2 + $0x10] sm:$0xff]
          %v446 = vld [vmem:[#allocation2 + $0x18] sm:$0xff]
          %v447 = vld [vmem:[%s283] sm:$0x1]
          %v449 = vlaneseq
          %v450 = vshrl.u32 %v449, 7
          %v451 = vsub.s32 0, %v450
          %v452 = vrot.slane %v447, %v451
          %v454 = vadd.f32 %v443, %v452
          %v455 = vadd.f32 %v444, %v452
          %v456 = vadd.f32 %v445, %v452
          %v457 = vadd.f32 %v446, %v452
          %458 = vst [vmem:[%s274] sm:$0xff] %v454
          %459 = vst [vmem:[%s274 + $0x8] sm:$0xff] %v455
          %460 = vst [vmem:[%s274 + $0x10] sm:$0xff] %v456
          %461 = vst [vmem:[%s274 + $0x18] sm:$0xff] %v457
        $region48: #{tpu_custom_call.1} parent=31 // pred_fallthru
          _
        %s462 = sand.u32 %s134, 1
        %s463 = scalar_lea.sflag [#allocation5], %s462
        %s464 = sand.u32 %s134, 1
        %s465 = smul.addr %s464, 32
        %s466 = scalar_lea.vmem [#allocation8], %s465
        // Predicated region
        $region49: #{tpu_custom_call.1} parent=31 // pred_check
          %p467 = pneg %p144
        $region50: #{tpu_custom_call.1} parent=31 // pred_check_branch
          %469 = sbr.rel (%p467) target = $region52
        $region51: #{tpu_custom_call.1} parent=31 // pred_region
          %s470 = smul.u32 4, %s28
          %s471 = ssub.s32 9, %s470
          %p472 = scmp.lt.s32.totalorder %s471, 4
          %s473 = scalar_select %p472, %s471, 4
          %s474 = smul.u32 128, %s473
          %s476 = ssub.s32 512, %s474
          %477 = vsyncadd %s463, %s476
          %p478 = scmp.ne.s32.totalorder 0, %s474
          %s479 = smul.addr %s470, 3
          %s480 = sadd.s32 %s29, %s479
          %s481 = smul.addr %s480, 128
          %s482 = scalar_lea.hbm %s3, %s481
          %s483 = smul.u32 8, %s473
          %s484 = sshll.u32 %s466, 4
          %s485 = int_to_ptr.vmem [resolvable:$true] %s484
          %s486 = sshll.u32 %s483, 4
          %490 = dma.vmem_to_hbm [thread:$0]  (%p478), %s485, %s486, %s482, %s463, 128, 384, 8
        $region52: #{tpu_custom_call.1} parent=31 // pred_fallthru
          _
      $region32: #{tpu_custom_call.1} parent=5 // pred_fallthru
        _
      %p491 = scmp.le.s32.totalorder 2, %s18
      // Predicated region
      $region53: #{tpu_custom_call.1} parent=5 // pred_check
        %p492 = pneg %p491
      $region54: #{tpu_custom_call.1} parent=5 // pred_check_branch
        %494 = sbr.rel (%p492) target = $region56
      $region55: #{tpu_custom_call.1} parent=5 // pred_region
        %s495 = ssub.s32 %s18, 2
        // Predicated region
        $region57: #{tpu_custom_call.1} parent=55 // pred_check
          %p496 = pneg %p150
        $region58: #{tpu_custom_call.1} parent=55 // pred_check_branch
          %498 = sbr.rel (%p496) target = $region60
        $region59: #{tpu_custom_call.1} parent=55 // pred_region
          %s499 = sand.u32 %s135, 1
          %s500 = scalar_lea.sflag [#allocation5], %s499
          %s501 = sand.u32 %s135, 1
          %s502 = smul.addr %s501, 32
          %s503 = scalar_lea.vmem [#allocation8], %s502
          %504 = dma.done %s500, 512
        $region60: #{tpu_custom_call.1} parent=55 // pred_fallthru
          _
      $region56: #{tpu_custom_call.1} parent=5 // pred_fallthru
        _
    $region6: #{tpu_custom_call.1} parent=1 // loop_footer
      %s22 = sadd.s32 1, %s18
    $region7: #{tpu_custom_call.1} parent=1 // loop_footer_branch
      %17 = sbr.rel target = $region3
    $region8: #{tpu_custom_call.1} parent=1 // loop_exit
      _
    %505 = vsyncpa [#allocation4], 1
    %s506 = scalar_lea.sflag [#allocation4], 1
    %507 = vsyncpa %s506, 1
    %508 = vsyncpa [#allocation7], 1
    %s509 = scalar_lea.sflag [#allocation7], 1
    %510 = vsyncpa %s509, 1
    %511 = vsyncpa [#allocation5], 1
    %s512 = scalar_lea.sflag [#allocation5], 1
    %513 = vsyncpa %s512, 1

</llo_original>
